<compile_context>
chip_gen: v5e
topology: v5e:2x2
jax: 0.10.0
libtpu: 0.0.40
codegen_flags: <defaults>
</compile_context>

<pallas_src>
import functools

import jax
import jax.numpy as jnp
from jax.experimental import pallas as pl
from jax.experimental.pallas import tpu as pltpu

_FEAT = 6  # projector input features (fixed by the module: nn.Linear(6, H))


def _hist_attn_kernel(score_ref, hidden_ref, w_ref, b_ref, out_ref, *opt_wts_ref,
                      n_hist):
    # score_ref : (TB, N*6)   hidden_ref : (TB, N*H)
    # w_ref     : (6, H)      b_ref      : (1, H)
    # out_ref   : (TB, H)     opt_wts_ref: optionally ((TB, N*H),)
    N = n_hist
    H = hidden_ref.shape[-1] // N
    F = score_ref.shape[-1] // N

    score = score_ref[...]                      # (TB, N*F)
    w = w_ref[...]                              # (F, H)
    bias = b_ref[...]                           # (1, H)

    # Projection + ReLU, one (TB, H) chunk per history step; VPU FMAs only
    # (K=6 is far too small to be worth an MXU pass).
    proj = []
    for n in range(N):
        acc = bias                                            # (1, H), broadcasts up
        for f in range(F):
            col = score[:, n * F + f: n * F + f + 1]          # (TB, 1)
            acc = acc + col * w[f: f + 1, :]                  # (TB, H)
        proj.append(jnp.maximum(acc, 0.0))

    # Softmax over the history axis (PyTorch dim=1): chunk-wise tree reductions.
    m = proj[0]
    for n in range(1, N):
        m = jnp.maximum(m, proj[n])             # (TB, H)
    es = [jnp.exp(p - m) for p in proj]
    denom = es[0]
    for n in range(1, N):
        denom = denom + es[n]                   # (TB, H)
    inv = 1.0 / denom                           # exact; one reciprocal per (TB, H)
    wts = [e * inv for e in es]                 # N chunks of (TB, H)

    # Optional lane-dense weights writeback: chunk n occupies lanes [n*H, (n+1)*H).
    if opt_wts_ref:
        opt_wts_ref[0][...] = jnp.concatenate(wts, axis=-1)   # (TB, N*H)

    # Attention-weighted sum over the history axis.
    hidden = hidden_ref[...]                    # (TB, N*H)
    out = hidden[:, 0:H] * wts[0]
    for n in range(1, N):
        out = out + hidden[:, n * H:(n + 1) * H] * wts[n]
    out_ref[...] = out                          # (TB, H)


def _round_up(x, m):
    return ((x + m - 1) // m) * m


def history_attention_net(hidden, score, w, b, *, block_b=None,
                          return_weights=True, min_grid_steps=1,
                          vmem_limit_bytes=32 * 1024 * 1024):
    """hidden: (B, N, H), score: (B, N, 6), w: (6, H), b: (1, H)."""
    B, N, H = hidden.shape
    assert score.shape == (B, N, _FEAT)
    assert w.shape == (_FEAT, H) and b.shape == (1, H)

    # Contiguous reshapes in HBM (free): lane-dense minor dims N*H / N*6.
    hidden_flat = hidden.reshape(B, N * H)
    score_flat = score.reshape(B, N * _FEAT)

    if block_b is None:
        # Lane-padded f32 bytes per batch row; x2 for double-buffered streams.
        lanes = (_round_up(N * H, 128)                                   # hidden in
                 + _round_up(N * _FEAT, 128)                             # score in
                 + _round_up(H, 128)                                     # atten out
                 + (_round_up(N * H, 128) if return_weights else 0))     # weights out
        per_row = 2 * 4 * lanes
        budget = (3 * vmem_limit_bytes) // 4    # headroom for W/bias/overheads
        block_b = max(1, budget // per_row)
    # NOTE: on v7x pass min_grid_steps=2 so the "parallel" batch axis gives both
    # TensorCores work; on v5e/v6e (single TC) one large block is best and
    # vmem_limit_bytes can be raised toward 64-96 MiB.
    block_b = min(block_b, pl.cdiv(B, max(min_grid_steps, 1)))
    TB = min(block_b, B)
    if TB < B:
        TB = min(B, max(8, (TB // 8) * 8))      # keep blocks sublane-aligned
    grid = (pl.cdiv(B, TB),)

    out_shape = [jax.ShapeDtypeStruct((B, H), jnp.float32)]       # atten_result
    out_specs = [pl.BlockSpec((TB, H), lambda bi: (bi, 0))]
    if return_weights:
        out_shape.append(jax.ShapeDtypeStruct((B, N * H), jnp.float32))
        out_specs.append(pl.BlockSpec((TB, N * H), lambda bi: (bi, 0)))

    grid_spec = pltpu.PrefetchScalarGridSpec(
        num_scalar_prefetch=0,
        grid=grid,
        in_specs=[
            pl.BlockSpec((TB, N * _FEAT), lambda bi: (bi, 0)),    # score (flat)
            pl.BlockSpec((TB, N * H), lambda bi: (bi, 0)),        # hidden (flat)
            pl.BlockSpec((_FEAT, H), lambda bi: (0, 0)),          # W
            pl.BlockSpec((1, H), lambda bi: (0, 0)),              # bias
        ],
        out_specs=out_specs,
    )

    results = pl.pallas_call(
        functools.partial(_hist_attn_kernel, n_hist=N),
        out_shape=out_shape,
        grid_spec=grid_spec,
        compiler_params=pltpu.CompilerParams(
            dimension_semantics=("parallel",),
            vmem_limit_bytes=vmem_limit_bytes,
        ),
    )(score_flat, hidden_flat, w, b)

    atten = results[0]
    if return_weights:
        return atten, results[1].reshape(B, N, H)
    return atten, None


def _reference(hidden, score, w, b):
    proj = jnp.maximum(jnp.einsum("bnf,fh->bnh", score, w) + b[None, :, :], 0.0)
    weights = jax.nn.softmax(proj, axis=1)
    atten = jnp.sum(hidden * weights, axis=1)
    return atten, weights


if __name__ == "__main__":
    B, N, H = 2, 8, 32   # hist_hidden_size = 32, 8 history steps

    key = jax.random.PRNGKey(0)
    k1, k2, k3, k4 = jax.random.split(key, 4)

    hidden = jax.random.normal(k1, (B, N, H), dtype=jnp.float32)
    score = jax.random.normal(k2, (B, N, _FEAT), dtype=jnp.float32)
    # deterministic "Linear(6, H)" parameters
    w = jax.random.normal(k3, (_FEAT, H), dtype=jnp.float32) * 0.3
    b = jax.random.normal(k4, (1, H), dtype=jnp.float32) * 0.1

    atten_result, weights = history_attention_net(hidden, score, w, b)
    jax.block_until_ready(atten_result)
    jax.block_until_ready(weights)

    ref_atten, ref_weights = _reference(hidden, score, w, b)
    assert jnp.allclose(atten_result, ref_atten, atol=1e-5, rtol=1e-5)
    assert jnp.allclose(weights, ref_weights, atol=1e-5, rtol=1e-5)

    # Exercise the reduced-HBM-traffic path (weights writeback dropped).
    atten_only, _ = history_attention_net(hidden, score, w, b, return_weights=False)
    jax.block_until_ready(atten_only)
    assert jnp.allclose(atten_only, ref_atten, atol=1e-5, rtol=1e-5)

    print("KERNEL_OK")
</pallas_src>

<mosaic_0001>
module attributes {stable_mosaic.version = 11 : i64} {
  func.func @_hist_attn_kernel(%arg0: i32, %arg1: memref<2x48xf32, #tpu.memory_space<vmem>>, %arg2: memref<2x256xf32, #tpu.memory_space<vmem>>, %arg3: memref<6x32xf32, #tpu.memory_space<vmem>>, %arg4: memref<1x32xf32, #tpu.memory_space<vmem>>, %arg5: memref<2x32xf32, #tpu.memory_space<vmem>>, %arg6: memref<2x256xf32, #tpu.memory_space<vmem>>) attributes {dimension_semantics = [#tpu.dimension_semantics<parallel>], iteration_bounds = array<i64: 1>, scalar_prefetch = 0 : i64, scratch_operands = 0 : i64, tpu.core_type = #tpu.core_type<tc>, window_params = [{transform_indices = @transform_0, window_bounds = array<i64: 2, 48>}, {transform_indices = @transform_1, window_bounds = array<i64: 2, 256>}, {pipeline_mode = #tpu.pipeline_mode<synchronous>, transform_indices = @transform_2, window_bounds = array<i64: 6, 32>}, {pipeline_mode = #tpu.pipeline_mode<synchronous>, transform_indices = @transform_3, window_bounds = array<i64: 1, 32>}, {transform_indices = @transform_4, window_bounds = array<i64: 2, 32>}, {transform_indices = @transform_5, window_bounds = array<i64: 2, 256>}]} {
    %c0 = arith.constant 0 : index
    %c0_0 = arith.constant 0 : index
    %0 = vector.load %arg1[%c0, %c0_0] : memref<2x48xf32, #tpu.memory_space<vmem>>, vector<2x48xf32>
    %c0_1 = arith.constant 0 : index
    %c0_2 = arith.constant 0 : index
    %1 = vector.load %arg3[%c0_1, %c0_2] : memref<6x32xf32, #tpu.memory_space<vmem>>, vector<6x32xf32>
    %c0_3 = arith.constant 0 : index
    %c0_4 = arith.constant 0 : index
    %2 = vector.load %arg4[%c0_3, %c0_4] : memref<1x32xf32, #tpu.memory_space<vmem>>, vector<1x32xf32>
    %3 = vector.extract_strided_slice %0 {offsets = [0, 0], sizes = [2, 1], strides = [1, 1]} : vector<2x48xf32> to vector<2x1xf32>
    %4 = vector.extract_strided_slice %1 {offsets = [0, 0], sizes = [1, 32], strides = [1, 1]} : vector<6x32xf32> to vector<1x32xf32>
    %5 = vector.broadcast %3 : vector<2x1xf32> to vector<2x32xf32>
    %6 = vector.broadcast %4 : vector<1x32xf32> to vector<2x32xf32>
    %7 = arith.mulf %5, %6 : vector<2x32xf32>
    %8 = vector.broadcast %2 : vector<1x32xf32> to vector<2x32xf32>
    %9 = arith.addf %8, %7 : vector<2x32xf32>
    %10 = vector.extract_strided_slice %0 {offsets = [0, 1], sizes = [2, 1], strides = [1, 1]} : vector<2x48xf32> to vector<2x1xf32>
    %11 = vector.extract_strided_slice %1 {offsets = [1, 0], sizes = [1, 32], strides = [1, 1]} : vector<6x32xf32> to vector<1x32xf32>
    %12 = vector.broadcast %10 : vector<2x1xf32> to vector<2x32xf32>
    %13 = vector.broadcast %11 : vector<1x32xf32> to vector<2x32xf32>
    %14 = arith.mulf %12, %13 : vector<2x32xf32>
    %15 = arith.addf %9, %14 : vector<2x32xf32>
    %16 = vector.extract_strided_slice %0 {offsets = [0, 2], sizes = [2, 1], strides = [1, 1]} : vector<2x48xf32> to vector<2x1xf32>
    %17 = vector.extract_strided_slice %1 {offsets = [2, 0], sizes = [1, 32], strides = [1, 1]} : vector<6x32xf32> to vector<1x32xf32>
    %18 = vector.broadcast %16 : vector<2x1xf32> to vector<2x32xf32>
    %19 = vector.broadcast %17 : vector<1x32xf32> to vector<2x32xf32>
    %20 = arith.mulf %18, %19 : vector<2x32xf32>
    %21 = arith.addf %15, %20 : vector<2x32xf32>
    %22 = vector.extract_strided_slice %0 {offsets = [0, 3], sizes = [2, 1], strides = [1, 1]} : vector<2x48xf32> to vector<2x1xf32>
    %23 = vector.extract_strided_slice %1 {offsets = [3, 0], sizes = [1, 32], strides = [1, 1]} : vector<6x32xf32> to vector<1x32xf32>
    %24 = vector.broadcast %22 : vector<2x1xf32> to vector<2x32xf32>
    %25 = vector.broadcast %23 : vector<1x32xf32> to vector<2x32xf32>
    %26 = arith.mulf %24, %25 : vector<2x32xf32>
    %27 = arith.addf %21, %26 : vector<2x32xf32>
    %28 = vector.extract_strided_slice %0 {offsets = [0, 4], sizes = [2, 1], strides = [1, 1]} : vector<2x48xf32> to vector<2x1xf32>
    %29 = vector.extract_strided_slice %1 {offsets = [4, 0], sizes = [1, 32], strides = [1, 1]} : vector<6x32xf32> to vector<1x32xf32>
    %30 = vector.broadcast %28 : vector<2x1xf32> to vector<2x32xf32>
    %31 = vector.broadcast %29 : vector<1x32xf32> to vector<2x32xf32>
    %32 = arith.mulf %30, %31 : vector<2x32xf32>
    %33 = arith.addf %27, %32 : vector<2x32xf32>
    %34 = vector.extract_strided_slice %0 {offsets = [0, 5], sizes = [2, 1], strides = [1, 1]} : vector<2x48xf32> to vector<2x1xf32>
    %35 = vector.extract_strided_slice %1 {offsets = [5, 0], sizes = [1, 32], strides = [1, 1]} : vector<6x32xf32> to vector<1x32xf32>
    %36 = vector.broadcast %34 : vector<2x1xf32> to vector<2x32xf32>
    %37 = vector.broadcast %35 : vector<1x32xf32> to vector<2x32xf32>
    %38 = arith.mulf %36, %37 : vector<2x32xf32>
    %39 = arith.addf %33, %38 : vector<2x32xf32>
    %cst = arith.constant 0.000000e+00 : f32
    %40 = vector.broadcast %cst : f32 to vector<2x32xf32>
    %41 = arith.maximumf %39, %40 : vector<2x32xf32>
    %42 = vector.extract_strided_slice %0 {offsets = [0, 6], sizes = [2, 1], strides = [1, 1]} : vector<2x48xf32> to vector<2x1xf32>
    %43 = vector.extract_strided_slice %1 {offsets = [0, 0], sizes = [1, 32], strides = [1, 1]} : vector<6x32xf32> to vector<1x32xf32>
    %44 = vector.broadcast %42 : vector<2x1xf32> to vector<2x32xf32>
    %45 = vector.broadcast %43 : vector<1x32xf32> to vector<2x32xf32>
    %46 = arith.mulf %44, %45 : vector<2x32xf32>
    %47 = vector.broadcast %2 : vector<1x32xf32> to vector<2x32xf32>
    %48 = arith.addf %47, %46 : vector<2x32xf32>
    %49 = vector.extract_strided_slice %0 {offsets = [0, 7], sizes = [2, 1], strides = [1, 1]} : vector<2x48xf32> to vector<2x1xf32>
    %50 = vector.extract_strided_slice %1 {offsets = [1, 0], sizes = [1, 32], strides = [1, 1]} : vector<6x32xf32> to vector<1x32xf32>
    %51 = vector.broadcast %49 : vector<2x1xf32> to vector<2x32xf32>
    %52 = vector.broadcast %50 : vector<1x32xf32> to vector<2x32xf32>
    %53 = arith.mulf %51, %52 : vector<2x32xf32>
    %54 = arith.addf %48, %53 : vector<2x32xf32>
    %55 = vector.extract_strided_slice %0 {offsets = [0, 8], sizes = [2, 1], strides = [1, 1]} : vector<2x48xf32> to vector<2x1xf32>
    %56 = vector.extract_strided_slice %1 {offsets = [2, 0], sizes = [1, 32], strides = [1, 1]} : vector<6x32xf32> to vector<1x32xf32>
    %57 = vector.broadcast %55 : vector<2x1xf32> to vector<2x32xf32>
    %58 = vector.broadcast %56 : vector<1x32xf32> to vector<2x32xf32>
    %59 = arith.mulf %57, %58 : vector<2x32xf32>
    %60 = arith.addf %54, %59 : vector<2x32xf32>
    %61 = vector.extract_strided_slice %0 {offsets = [0, 9], sizes = [2, 1], strides = [1, 1]} : vector<2x48xf32> to vector<2x1xf32>
    %62 = vector.extract_strided_slice %1 {offsets = [3, 0], sizes = [1, 32], strides = [1, 1]} : vector<6x32xf32> to vector<1x32xf32>
    %63 = vector.broadcast %61 : vector<2x1xf32> to vector<2x32xf32>
    %64 = vector.broadcast %62 : vector<1x32xf32> to vector<2x32xf32>
    %65 = arith.mulf %63, %64 : vector<2x32xf32>
    %66 = arith.addf %60, %65 : vector<2x32xf32>
    %67 = vector.extract_strided_slice %0 {offsets = [0, 10], sizes = [2, 1], strides = [1, 1]} : vector<2x48xf32> to vector<2x1xf32>
    %68 = vector.extract_strided_slice %1 {offsets = [4, 0], sizes = [1, 32], strides = [1, 1]} : vector<6x32xf32> to vector<1x32xf32>
    %69 = vector.broadcast %67 : vector<2x1xf32> to vector<2x32xf32>
    %70 = vector.broadcast %68 : vector<1x32xf32> to vector<2x32xf32>
    %71 = arith.mulf %69, %70 : vector<2x32xf32>
    %72 = arith.addf %66, %71 : vector<2x32xf32>
    %73 = vector.extract_strided_slice %0 {offsets = [0, 11], sizes = [2, 1], strides = [1, 1]} : vector<2x48xf32> to vector<2x1xf32>
    %74 = vector.extract_strided_slice %1 {offsets = [5, 0], sizes = [1, 32], strides = [1, 1]} : vector<6x32xf32> to vector<1x32xf32>
    %75 = vector.broadcast %73 : vector<2x1xf32> to vector<2x32xf32>
    %76 = vector.broadcast %74 : vector<1x32xf32> to vector<2x32xf32>
    %77 = arith.mulf %75, %76 : vector<2x32xf32>
    %78 = arith.addf %72, %77 : vector<2x32xf32>
    %cst_5 = arith.constant 0.000000e+00 : f32
    %79 = vector.broadcast %cst_5 : f32 to vector<2x32xf32>
    %80 = arith.maximumf %78, %79 : vector<2x32xf32>
    %81 = vector.extract_strided_slice %0 {offsets = [0, 12], sizes = [2, 1], strides = [1, 1]} : vector<2x48xf32> to vector<2x1xf32>
    %82 = vector.extract_strided_slice %1 {offsets = [0, 0], sizes = [1, 32], strides = [1, 1]} : vector<6x32xf32> to vector<1x32xf32>
    %83 = vector.broadcast %81 : vector<2x1xf32> to vector<2x32xf32>
    %84 = vector.broadcast %82 : vector<1x32xf32> to vector<2x32xf32>
    %85 = arith.mulf %83, %84 : vector<2x32xf32>
    %86 = vector.broadcast %2 : vector<1x32xf32> to vector<2x32xf32>
    %87 = arith.addf %86, %85 : vector<2x32xf32>
    %88 = vector.extract_strided_slice %0 {offsets = [0, 13], sizes = [2, 1], strides = [1, 1]} : vector<2x48xf32> to vector<2x1xf32>
    %89 = vector.extract_strided_slice %1 {offsets = [1, 0], sizes = [1, 32], strides = [1, 1]} : vector<6x32xf32> to vector<1x32xf32>
    %90 = vector.broadcast %88 : vector<2x1xf32> to vector<2x32xf32>
    %91 = vector.broadcast %89 : vector<1x32xf32> to vector<2x32xf32>
    %92 = arith.mulf %90, %91 : vector<2x32xf32>
    %93 = arith.addf %87, %92 : vector<2x32xf32>
    %94 = vector.extract_strided_slice %0 {offsets = [0, 14], sizes = [2, 1], strides = [1, 1]} : vector<2x48xf32> to vector<2x1xf32>
    %95 = vector.extract_strided_slice %1 {offsets = [2, 0], sizes = [1, 32], strides = [1, 1]} : vector<6x32xf32> to vector<1x32xf32>
    %96 = vector.broadcast %94 : vector<2x1xf32> to vector<2x32xf32>
    %97 = vector.broadcast %95 : vector<1x32xf32> to vector<2x32xf32>
    %98 = arith.mulf %96, %97 : vector<2x32xf32>
    %99 = arith.addf %93, %98 : vector<2x32xf32>
    %100 = vector.extract_strided_slice %0 {offsets = [0, 15], sizes = [2, 1], strides = [1, 1]} : vector<2x48xf32> to vector<2x1xf32>
    %101 = vector.extract_strided_slice %1 {offsets = [3, 0], sizes = [1, 32], strides = [1, 1]} : vector<6x32xf32> to vector<1x32xf32>
    %102 = vector.broadcast %100 : vector<2x1xf32> to vector<2x32xf32>
    %103 = vector.broadcast %101 : vector<1x32xf32> to vector<2x32xf32>
    %104 = arith.mulf %102, %103 : vector<2x32xf32>
    %105 = arith.addf %99, %104 : vector<2x32xf32>
    %106 = vector.extract_strided_slice %0 {offsets = [0, 16], sizes = [2, 1], strides = [1, 1]} : vector<2x48xf32> to vector<2x1xf32>
    %107 = vector.extract_strided_slice %1 {offsets = [4, 0], sizes = [1, 32], strides = [1, 1]} : vector<6x32xf32> to vector<1x32xf32>
    %108 = vector.broadcast %106 : vector<2x1xf32> to vector<2x32xf32>
    %109 = vector.broadcast %107 : vector<1x32xf32> to vector<2x32xf32>
    %110 = arith.mulf %108, %109 : vector<2x32xf32>
    %111 = arith.addf %105, %110 : vector<2x32xf32>
    %112 = vector.extract_strided_slice %0 {offsets = [0, 17], sizes = [2, 1], strides = [1, 1]} : vector<2x48xf32> to vector<2x1xf32>
    %113 = vector.extract_strided_slice %1 {offsets = [5, 0], sizes = [1, 32], strides = [1, 1]} : vector<6x32xf32> to vector<1x32xf32>
    %114 = vector.broadcast %112 : vector<2x1xf32> to vector<2x32xf32>
    %115 = vector.broadcast %113 : vector<1x32xf32> to vector<2x32xf32>
    %116 = arith.mulf %114, %115 : vector<2x32xf32>
    %117 = arith.addf %111, %116 : vector<2x32xf32>
    %cst_6 = arith.constant 0.000000e+00 : f32
    %118 = vector.broadcast %cst_6 : f32 to vector<2x32xf32>
    %119 = arith.maximumf %117, %118 : vector<2x32xf32>
    %120 = vector.extract_strided_slice %0 {offsets = [0, 18], sizes = [2, 1], strides = [1, 1]} : vector<2x48xf32> to vector<2x1xf32>
    %121 = vector.extract_strided_slice %1 {offsets = [0, 0], sizes = [1, 32], strides = [1, 1]} : vector<6x32xf32> to vector<1x32xf32>
    %122 = vector.broadcast %120 : vector<2x1xf32> to vector<2x32xf32>
    %123 = vector.broadcast %121 : vector<1x32xf32> to vector<2x32xf32>
    %124 = arith.mulf %122, %123 : vector<2x32xf32>
    %125 = vector.broadcast %2 : vector<1x32xf32> to vector<2x32xf32>
    %126 = arith.addf %125, %124 : vector<2x32xf32>
    %127 = vector.extract_strided_slice %0 {offsets = [0, 19], sizes = [2, 1], strides = [1, 1]} : vector<2x48xf32> to vector<2x1xf32>
    %128 = vector.extract_strided_slice %1 {offsets = [1, 0], sizes = [1, 32], strides = [1, 1]} : vector<6x32xf32> to vector<1x32xf32>
    %129 = vector.broadcast %127 : vector<2x1xf32> to vector<2x32xf32>
    %130 = vector.broadcast %128 : vector<1x32xf32> to vector<2x32xf32>
    %131 = arith.mulf %129, %130 : vector<2x32xf32>
    %132 = arith.addf %126, %131 : vector<2x32xf32>
    %133 = vector.extract_strided_slice %0 {offsets = [0, 20], sizes = [2, 1], strides = [1, 1]} : vector<2x48xf32> to vector<2x1xf32>
    %134 = vector.extract_strided_slice %1 {offsets = [2, 0], sizes = [1, 32], strides = [1, 1]} : vector<6x32xf32> to vector<1x32xf32>
    %135 = vector.broadcast %133 : vector<2x1xf32> to vector<2x32xf32>
    %136 = vector.broadcast %134 : vector<1x32xf32> to vector<2x32xf32>
    %137 = arith.mulf %135, %136 : vector<2x32xf32>
    %138 = arith.addf %132, %137 : vector<2x32xf32>
    %139 = vector.extract_strided_slice %0 {offsets = [0, 21], sizes = [2, 1], strides = [1, 1]} : vector<2x48xf32> to vector<2x1xf32>
    %140 = vector.extract_strided_slice %1 {offsets = [3, 0], sizes = [1, 32], strides = [1, 1]} : vector<6x32xf32> to vector<1x32xf32>
    %141 = vector.broadcast %139 : vector<2x1xf32> to vector<2x32xf32>
    %142 = vector.broadcast %140 : vector<1x32xf32> to vector<2x32xf32>
    %143 = arith.mulf %141, %142 : vector<2x32xf32>
    %144 = arith.addf %138, %143 : vector<2x32xf32>
    %145 = vector.extract_strided_slice %0 {offsets = [0, 22], sizes = [2, 1], strides = [1, 1]} : vector<2x48xf32> to vector<2x1xf32>
    %146 = vector.extract_strided_slice %1 {offsets = [4, 0], sizes = [1, 32], strides = [1, 1]} : vector<6x32xf32> to vector<1x32xf32>
    %147 = vector.broadcast %145 : vector<2x1xf32> to vector<2x32xf32>
    %148 = vector.broadcast %146 : vector<1x32xf32> to vector<2x32xf32>
    %149 = arith.mulf %147, %148 : vector<2x32xf32>
    %150 = arith.addf %144, %149 : vector<2x32xf32>
    %151 = vector.extract_strided_slice %0 {offsets = [0, 23], sizes = [2, 1], strides = [1, 1]} : vector<2x48xf32> to vector<2x1xf32>
    %152 = vector.extract_strided_slice %1 {offsets = [5, 0], sizes = [1, 32], strides = [1, 1]} : vector<6x32xf32> to vector<1x32xf32>
    %153 = vector.broadcast %151 : vector<2x1xf32> to vector<2x32xf32>
    %154 = vector.broadcast %152 : vector<1x32xf32> to vector<2x32xf32>
    %155 = arith.mulf %153, %154 : vector<2x32xf32>
    %156 = arith.addf %150, %155 : vector<2x32xf32>
    %cst_7 = arith.constant 0.000000e+00 : f32
    %157 = vector.broadcast %cst_7 : f32 to vector<2x32xf32>
    %158 = arith.maximumf %156, %157 : vector<2x32xf32>
    %159 = vector.extract_strided_slice %0 {offsets = [0, 24], sizes = [2, 1], strides = [1, 1]} : vector<2x48xf32> to vector<2x1xf32>
    %160 = vector.extract_strided_slice %1 {offsets = [0, 0], sizes = [1, 32], strides = [1, 1]} : vector<6x32xf32> to vector<1x32xf32>
    %161 = vector.broadcast %159 : vector<2x1xf32> to vector<2x32xf32>
    %162 = vector.broadcast %160 : vector<1x32xf32> to vector<2x32xf32>
    %163 = arith.mulf %161, %162 : vector<2x32xf32>
    %164 = vector.broadcast %2 : vector<1x32xf32> to vector<2x32xf32>
    %165 = arith.addf %164, %163 : vector<2x32xf32>
    %166 = vector.extract_strided_slice %0 {offsets = [0, 25], sizes = [2, 1], strides = [1, 1]} : vector<2x48xf32> to vector<2x1xf32>
    %167 = vector.extract_strided_slice %1 {offsets = [1, 0], sizes = [1, 32], strides = [1, 1]} : vector<6x32xf32> to vector<1x32xf32>
    %168 = vector.broadcast %166 : vector<2x1xf32> to vector<2x32xf32>
    %169 = vector.broadcast %167 : vector<1x32xf32> to vector<2x32xf32>
    %170 = arith.mulf %168, %169 : vector<2x32xf32>
    %171 = arith.addf %165, %170 : vector<2x32xf32>
    %172 = vector.extract_strided_slice %0 {offsets = [0, 26], sizes = [2, 1], strides = [1, 1]} : vector<2x48xf32> to vector<2x1xf32>
    %173 = vector.extract_strided_slice %1 {offsets = [2, 0], sizes = [1, 32], strides = [1, 1]} : vector<6x32xf32> to vector<1x32xf32>
    %174 = vector.broadcast %172 : vector<2x1xf32> to vector<2x32xf32>
    %175 = vector.broadcast %173 : vector<1x32xf32> to vector<2x32xf32>
    %176 = arith.mulf %174, %175 : vector<2x32xf32>
    %177 = arith.addf %171, %176 : vector<2x32xf32>
    %178 = vector.extract_strided_slice %0 {offsets = [0, 27], sizes = [2, 1], strides = [1, 1]} : vector<2x48xf32> to vector<2x1xf32>
    %179 = vector.extract_strided_slice %1 {offsets = [3, 0], sizes = [1, 32], strides = [1, 1]} : vector<6x32xf32> to vector<1x32xf32>
    %180 = vector.broadcast %178 : vector<2x1xf32> to vector<2x32xf32>
    %181 = vector.broadcast %179 : vector<1x32xf32> to vector<2x32xf32>
    %182 = arith.mulf %180, %181 : vector<2x32xf32>
    %183 = arith.addf %177, %182 : vector<2x32xf32>
    %184 = vector.extract_strided_slice %0 {offsets = [0, 28], sizes = [2, 1], strides = [1, 1]} : vector<2x48xf32> to vector<2x1xf32>
    %185 = vector.extract_strided_slice %1 {offsets = [4, 0], sizes = [1, 32], strides = [1, 1]} : vector<6x32xf32> to vector<1x32xf32>
    %186 = vector.broadcast %184 : vector<2x1xf32> to vector<2x32xf32>
    %187 = vector.broadcast %185 : vector<1x32xf32> to vector<2x32xf32>
    %188 = arith.mulf %186, %187 : vector<2x32xf32>
    %189 = arith.addf %183, %188 : vector<2x32xf32>
    %190 = vector.extract_strided_slice %0 {offsets = [0, 29], sizes = [2, 1], strides = [1, 1]} : vector<2x48xf32> to vector<2x1xf32>
    %191 = vector.extract_strided_slice %1 {offsets = [5, 0], sizes = [1, 32], strides = [1, 1]} : vector<6x32xf32> to vector<1x32xf32>
    %192 = vector.broadcast %190 : vector<2x1xf32> to vector<2x32xf32>
    %193 = vector.broadcast %191 : vector<1x32xf32> to vector<2x32xf32>
    %194 = arith.mulf %192, %193 : vector<2x32xf32>
    %195 = arith.addf %189, %194 : vector<2x32xf32>
    %cst_8 = arith.constant 0.000000e+00 : f32
    %196 = vector.broadcast %cst_8 : f32 to vector<2x32xf32>
    %197 = arith.maximumf %195, %196 : vector<2x32xf32>
    %198 = vector.extract_strided_slice %0 {offsets = [0, 30], sizes = [2, 1], strides = [1, 1]} : vector<2x48xf32> to vector<2x1xf32>
    %199 = vector.extract_strided_slice %1 {offsets = [0, 0], sizes = [1, 32], strides = [1, 1]} : vector<6x32xf32> to vector<1x32xf32>
    %200 = vector.broadcast %198 : vector<2x1xf32> to vector<2x32xf32>
    %201 = vector.broadcast %199 : vector<1x32xf32> to vector<2x32xf32>
    %202 = arith.mulf %200, %201 : vector<2x32xf32>
    %203 = vector.broadcast %2 : vector<1x32xf32> to vector<2x32xf32>
    %204 = arith.addf %203, %202 : vector<2x32xf32>
    %205 = vector.extract_strided_slice %0 {offsets = [0, 31], sizes = [2, 1], strides = [1, 1]} : vector<2x48xf32> to vector<2x1xf32>
    %206 = vector.extract_strided_slice %1 {offsets = [1, 0], sizes = [1, 32], strides = [1, 1]} : vector<6x32xf32> to vector<1x32xf32>
    %207 = vector.broadcast %205 : vector<2x1xf32> to vector<2x32xf32>
    %208 = vector.broadcast %206 : vector<1x32xf32> to vector<2x32xf32>
    %209 = arith.mulf %207, %208 : vector<2x32xf32>
    %210 = arith.addf %204, %209 : vector<2x32xf32>
    %211 = vector.extract_strided_slice %0 {offsets = [0, 32], sizes = [2, 1], strides = [1, 1]} : vector<2x48xf32> to vector<2x1xf32>
    %212 = vector.extract_strided_slice %1 {offsets = [2, 0], sizes = [1, 32], strides = [1, 1]} : vector<6x32xf32> to vector<1x32xf32>
    %213 = vector.broadcast %211 : vector<2x1xf32> to vector<2x32xf32>
    %214 = vector.broadcast %212 : vector<1x32xf32> to vector<2x32xf32>
    %215 = arith.mulf %213, %214 : vector<2x32xf32>
    %216 = arith.addf %210, %215 : vector<2x32xf32>
    %217 = vector.extract_strided_slice %0 {offsets = [0, 33], sizes = [2, 1], strides = [1, 1]} : vector<2x48xf32> to vector<2x1xf32>
    %218 = vector.extract_strided_slice %1 {offsets = [3, 0], sizes = [1, 32], strides = [1, 1]} : vector<6x32xf32> to vector<1x32xf32>
    %219 = vector.broadcast %217 : vector<2x1xf32> to vector<2x32xf32>
    %220 = vector.broadcast %218 : vector<1x32xf32> to vector<2x32xf32>
    %221 = arith.mulf %219, %220 : vector<2x32xf32>
    %222 = arith.addf %216, %221 : vector<2x32xf32>
    %223 = vector.extract_strided_slice %0 {offsets = [0, 34], sizes = [2, 1], strides = [1, 1]} : vector<2x48xf32> to vector<2x1xf32>
    %224 = vector.extract_strided_slice %1 {offsets = [4, 0], sizes = [1, 32], strides = [1, 1]} : vector<6x32xf32> to vector<1x32xf32>
    %225 = vector.broadcast %223 : vector<2x1xf32> to vector<2x32xf32>
    %226 = vector.broadcast %224 : vector<1x32xf32> to vector<2x32xf32>
    %227 = arith.mulf %225, %226 : vector<2x32xf32>
    %228 = arith.addf %222, %227 : vector<2x32xf32>
    %229 = vector.extract_strided_slice %0 {offsets = [0, 35], sizes = [2, 1], strides = [1, 1]} : vector<2x48xf32> to vector<2x1xf32>
    %230 = vector.extract_strided_slice %1 {offsets = [5, 0], sizes = [1, 32], strides = [1, 1]} : vector<6x32xf32> to vector<1x32xf32>
    %231 = vector.broadcast %229 : vector<2x1xf32> to vector<2x32xf32>
    %232 = vector.broadcast %230 : vector<1x32xf32> to vector<2x32xf32>
    %233 = arith.mulf %231, %232 : vector<2x32xf32>
    %234 = arith.addf %228, %233 : vector<2x32xf32>
    %cst_9 = arith.constant 0.000000e+00 : f32
    %235 = vector.broadcast %cst_9 : f32 to vector<2x32xf32>
    %236 = arith.maximumf %234, %235 : vector<2x32xf32>
    %237 = vector.extract_strided_slice %0 {offsets = [0, 36], sizes = [2, 1], strides = [1, 1]} : vector<2x48xf32> to vector<2x1xf32>
    %238 = vector.extract_strided_slice %1 {offsets = [0, 0], sizes = [1, 32], strides = [1, 1]} : vector<6x32xf32> to vector<1x32xf32>
    %239 = vector.broadcast %237 : vector<2x1xf32> to vector<2x32xf32>
    %240 = vector.broadcast %238 : vector<1x32xf32> to vector<2x32xf32>
    %241 = arith.mulf %239, %240 : vector<2x32xf32>
    %242 = vector.broadcast %2 : vector<1x32xf32> to vector<2x32xf32>
    %243 = arith.addf %242, %241 : vector<2x32xf32>
    %244 = vector.extract_strided_slice %0 {offsets = [0, 37], sizes = [2, 1], strides = [1, 1]} : vector<2x48xf32> to vector<2x1xf32>
    %245 = vector.extract_strided_slice %1 {offsets = [1, 0], sizes = [1, 32], strides = [1, 1]} : vector<6x32xf32> to vector<1x32xf32>
    %246 = vector.broadcast %244 : vector<2x1xf32> to vector<2x32xf32>
    %247 = vector.broadcast %245 : vector<1x32xf32> to vector<2x32xf32>
    %248 = arith.mulf %246, %247 : vector<2x32xf32>
    %249 = arith.addf %243, %248 : vector<2x32xf32>
    %250 = vector.extract_strided_slice %0 {offsets = [0, 38], sizes = [2, 1], strides = [1, 1]} : vector<2x48xf32> to vector<2x1xf32>
    %251 = vector.extract_strided_slice %1 {offsets = [2, 0], sizes = [1, 32], strides = [1, 1]} : vector<6x32xf32> to vector<1x32xf32>
    %252 = vector.broadcast %250 : vector<2x1xf32> to vector<2x32xf32>
    %253 = vector.broadcast %251 : vector<1x32xf32> to vector<2x32xf32>
    %254 = arith.mulf %252, %253 : vector<2x32xf32>
    %255 = arith.addf %249, %254 : vector<2x32xf32>
    %256 = vector.extract_strided_slice %0 {offsets = [0, 39], sizes = [2, 1], strides = [1, 1]} : vector<2x48xf32> to vector<2x1xf32>
    %257 = vector.extract_strided_slice %1 {offsets = [3, 0], sizes = [1, 32], strides = [1, 1]} : vector<6x32xf32> to vector<1x32xf32>
    %258 = vector.broadcast %256 : vector<2x1xf32> to vector<2x32xf32>
    %259 = vector.broadcast %257 : vector<1x32xf32> to vector<2x32xf32>
    %260 = arith.mulf %258, %259 : vector<2x32xf32>
    %261 = arith.addf %255, %260 : vector<2x32xf32>
    %262 = vector.extract_strided_slice %0 {offsets = [0, 40], sizes = [2, 1], strides = [1, 1]} : vector<2x48xf32> to vector<2x1xf32>
    %263 = vector.extract_strided_slice %1 {offsets = [4, 0], sizes = [1, 32], strides = [1, 1]} : vector<6x32xf32> to vector<1x32xf32>
    %264 = vector.broadcast %262 : vector<2x1xf32> to vector<2x32xf32>
    %265 = vector.broadcast %263 : vector<1x32xf32> to vector<2x32xf32>
    %266 = arith.mulf %264, %265 : vector<2x32xf32>
    %267 = arith.addf %261, %266 : vector<2x32xf32>
    %268 = vector.extract_strided_slice %0 {offsets = [0, 41], sizes = [2, 1], strides = [1, 1]} : vector<2x48xf32> to vector<2x1xf32>
    %269 = vector.extract_strided_slice %1 {offsets = [5, 0], sizes = [1, 32], strides = [1, 1]} : vector<6x32xf32> to vector<1x32xf32>
    %270 = vector.broadcast %268 : vector<2x1xf32> to vector<2x32xf32>
    %271 = vector.broadcast %269 : vector<1x32xf32> to vector<2x32xf32>
    %272 = arith.mulf %270, %271 : vector<2x32xf32>
    %273 = arith.addf %267, %272 : vector<2x32xf32>
    %cst_10 = arith.constant 0.000000e+00 : f32
    %274 = vector.broadcast %cst_10 : f32 to vector<2x32xf32>
    %275 = arith.maximumf %273, %274 : vector<2x32xf32>
    %276 = vector.extract_strided_slice %0 {offsets = [0, 42], sizes = [2, 1], strides = [1, 1]} : vector<2x48xf32> to vector<2x1xf32>
    %277 = vector.extract_strided_slice %1 {offsets = [0, 0], sizes = [1, 32], strides = [1, 1]} : vector<6x32xf32> to vector<1x32xf32>
    %278 = vector.broadcast %276 : vector<2x1xf32> to vector<2x32xf32>
    %279 = vector.broadcast %277 : vector<1x32xf32> to vector<2x32xf32>
    %280 = arith.mulf %278, %279 : vector<2x32xf32>
    %281 = vector.broadcast %2 : vector<1x32xf32> to vector<2x32xf32>
    %282 = arith.addf %281, %280 : vector<2x32xf32>
    %283 = vector.extract_strided_slice %0 {offsets = [0, 43], sizes = [2, 1], strides = [1, 1]} : vector<2x48xf32> to vector<2x1xf32>
    %284 = vector.extract_strided_slice %1 {offsets = [1, 0], sizes = [1, 32], strides = [1, 1]} : vector<6x32xf32> to vector<1x32xf32>
    %285 = vector.broadcast %283 : vector<2x1xf32> to vector<2x32xf32>
    %286 = vector.broadcast %284 : vector<1x32xf32> to vector<2x32xf32>
    %287 = arith.mulf %285, %286 : vector<2x32xf32>
    %288 = arith.addf %282, %287 : vector<2x32xf32>
    %289 = vector.extract_strided_slice %0 {offsets = [0, 44], sizes = [2, 1], strides = [1, 1]} : vector<2x48xf32> to vector<2x1xf32>
    %290 = vector.extract_strided_slice %1 {offsets = [2, 0], sizes = [1, 32], strides = [1, 1]} : vector<6x32xf32> to vector<1x32xf32>
    %291 = vector.broadcast %289 : vector<2x1xf32> to vector<2x32xf32>
    %292 = vector.broadcast %290 : vector<1x32xf32> to vector<2x32xf32>
    %293 = arith.mulf %291, %292 : vector<2x32xf32>
    %294 = arith.addf %288, %293 : vector<2x32xf32>
    %295 = vector.extract_strided_slice %0 {offsets = [0, 45], sizes = [2, 1], strides = [1, 1]} : vector<2x48xf32> to vector<2x1xf32>
    %296 = vector.extract_strided_slice %1 {offsets = [3, 0], sizes = [1, 32], strides = [1, 1]} : vector<6x32xf32> to vector<1x32xf32>
    %297 = vector.broadcast %295 : vector<2x1xf32> to vector<2x32xf32>
    %298 = vector.broadcast %296 : vector<1x32xf32> to vector<2x32xf32>
    %299 = arith.mulf %297, %298 : vector<2x32xf32>
    %300 = arith.addf %294, %299 : vector<2x32xf32>
    %301 = vector.extract_strided_slice %0 {offsets = [0, 46], sizes = [2, 1], strides = [1, 1]} : vector<2x48xf32> to vector<2x1xf32>
    %302 = vector.extract_strided_slice %1 {offsets = [4, 0], sizes = [1, 32], strides = [1, 1]} : vector<6x32xf32> to vector<1x32xf32>
    %303 = vector.broadcast %301 : vector<2x1xf32> to vector<2x32xf32>
    %304 = vector.broadcast %302 : vector<1x32xf32> to vector<2x32xf32>
    %305 = arith.mulf %303, %304 : vector<2x32xf32>
    %306 = arith.addf %300, %305 : vector<2x32xf32>
    %307 = vector.extract_strided_slice %0 {offsets = [0, 47], sizes = [2, 1], strides = [1, 1]} : vector<2x48xf32> to vector<2x1xf32>
    %308 = vector.extract_strided_slice %1 {offsets = [5, 0], sizes = [1, 32], strides = [1, 1]} : vector<6x32xf32> to vector<1x32xf32>
    %309 = vector.broadcast %307 : vector<2x1xf32> to vector<2x32xf32>
    %310 = vector.broadcast %308 : vector<1x32xf32> to vector<2x32xf32>
    %311 = arith.mulf %309, %310 : vector<2x32xf32>
    %312 = arith.addf %306, %311 : vector<2x32xf32>
    %cst_11 = arith.constant 0.000000e+00 : f32
    %313 = vector.broadcast %cst_11 : f32 to vector<2x32xf32>
    %314 = arith.maximumf %312, %313 : vector<2x32xf32>
    %315 = arith.maximumf %41, %80 : vector<2x32xf32>
    %316 = arith.maximumf %315, %119 : vector<2x32xf32>
    %317 = arith.maximumf %316, %158 : vector<2x32xf32>
    %318 = arith.maximumf %317, %197 : vector<2x32xf32>
    %319 = arith.maximumf %318, %236 : vector<2x32xf32>
    %320 = arith.maximumf %319, %275 : vector<2x32xf32>
    %321 = arith.maximumf %320, %314 : vector<2x32xf32>
    %322 = arith.subf %41, %321 : vector<2x32xf32>
    %323 = math.exp %322 : vector<2x32xf32>
    %324 = arith.subf %80, %321 : vector<2x32xf32>
    %325 = math.exp %324 : vector<2x32xf32>
    %326 = arith.subf %119, %321 : vector<2x32xf32>
    %327 = math.exp %326 : vector<2x32xf32>
    %328 = arith.subf %158, %321 : vector<2x32xf32>
    %329 = math.exp %328 : vector<2x32xf32>
    %330 = arith.subf %197, %321 : vector<2x32xf32>
    %331 = math.exp %330 : vector<2x32xf32>
    %332 = arith.subf %236, %321 : vector<2x32xf32>
    %333 = math.exp %332 : vector<2x32xf32>
    %334 = arith.subf %275, %321 : vector<2x32xf32>
    %335 = math.exp %334 : vector<2x32xf32>
    %336 = arith.subf %314, %321 : vector<2x32xf32>
    %337 = math.exp %336 : vector<2x32xf32>
    %338 = arith.addf %323, %325 : vector<2x32xf32>
    %339 = arith.addf %338, %327 : vector<2x32xf32>
    %340 = arith.addf %339, %329 : vector<2x32xf32>
    %341 = arith.addf %340, %331 : vector<2x32xf32>
    %342 = arith.addf %341, %333 : vector<2x32xf32>
    %343 = arith.addf %342, %335 : vector<2x32xf32>
    %344 = arith.addf %343, %337 : vector<2x32xf32>
    %cst_12 = arith.constant 1.000000e+00 : f32
    %345 = vector.broadcast %cst_12 : f32 to vector<2x32xf32>
    %346 = arith.divf %345, %344 : vector<2x32xf32>
    %347 = arith.mulf %323, %346 : vector<2x32xf32>
    %348 = arith.mulf %325, %346 : vector<2x32xf32>
    %349 = arith.mulf %327, %346 : vector<2x32xf32>
    %350 = arith.mulf %329, %346 : vector<2x32xf32>
    %351 = arith.mulf %331, %346 : vector<2x32xf32>
    %352 = arith.mulf %333, %346 : vector<2x32xf32>
    %353 = arith.mulf %335, %346 : vector<2x32xf32>
    %354 = arith.mulf %337, %346 : vector<2x32xf32>
    %355 = tpu.concatenate %347, %348, %349, %350, %351, %352, %353, %354 in 1 : vector<2x32xf32>, vector<2x32xf32>, vector<2x32xf32>, vector<2x32xf32>, vector<2x32xf32>, vector<2x32xf32>, vector<2x32xf32>, vector<2x32xf32> -> vector<2x256xf32>
    %c0_13 = arith.constant 0 : index
    %c0_14 = arith.constant 0 : index
    %356 = vector.load %arg6[%c0_13, %c0_14] : memref<2x256xf32, #tpu.memory_space<vmem>>, vector<2x256xf32>
    tpu.vector_store %arg6[%c0_13, %c0_14], %355 {strides = array<i32>} : memref<2x256xf32, #tpu.memory_space<vmem>>, vector<2x256xf32>,
    %c0_15 = arith.constant 0 : index
    %c0_16 = arith.constant 0 : index
    %357 = vector.load %arg2[%c0_15, %c0_16] : memref<2x256xf32, #tpu.memory_space<vmem>>, vector<2x256xf32>
    %358 = vector.extract_strided_slice %357 {offsets = [0, 0], sizes = [2, 32], strides = [1, 1]} : vector<2x256xf32> to vector<2x32xf32>
    %359 = arith.mulf %358, %347 : vector<2x32xf32>
    %360 = vector.extract_strided_slice %357 {offsets = [0, 32], sizes = [2, 32], strides = [1, 1]} : vector<2x256xf32> to vector<2x32xf32>
    %361 = arith.mulf %360, %348 : vector<2x32xf32>
    %362 = arith.addf %359, %361 : vector<2x32xf32>
    %363 = vector.extract_strided_slice %357 {offsets = [0, 64], sizes = [2, 32], strides = [1, 1]} : vector<2x256xf32> to vector<2x32xf32>
    %364 = arith.mulf %363, %349 : vector<2x32xf32>
    %365 = arith.addf %362, %364 : vector<2x32xf32>
    %366 = vector.extract_strided_slice %357 {offsets = [0, 96], sizes = [2, 32], strides = [1, 1]} : vector<2x256xf32> to vector<2x32xf32>
    %367 = arith.mulf %366, %350 : vector<2x32xf32>
    %368 = arith.addf %365, %367 : vector<2x32xf32>
    %369 = vector.extract_strided_slice %357 {offsets = [0, 128], sizes = [2, 32], strides = [1, 1]} : vector<2x256xf32> to vector<2x32xf32>
    %370 = arith.mulf %369, %351 : vector<2x32xf32>
    %371 = arith.addf %368, %370 : vector<2x32xf32>
    %372 = vector.extract_strided_slice %357 {offsets = [0, 160], sizes = [2, 32], strides = [1, 1]} : vector<2x256xf32> to vector<2x32xf32>
    %373 = arith.mulf %372, %352 : vector<2x32xf32>
    %374 = arith.addf %371, %373 : vector<2x32xf32>
    %375 = vector.extract_strided_slice %357 {offsets = [0, 192], sizes = [2, 32], strides = [1, 1]} : vector<2x256xf32> to vector<2x32xf32>
    %376 = arith.mulf %375, %353 : vector<2x32xf32>
    %377 = arith.addf %374, %376 : vector<2x32xf32>
    %378 = vector.extract_strided_slice %357 {offsets = [0, 224], sizes = [2, 32], strides = [1, 1]} : vector<2x256xf32> to vector<2x32xf32>
    %379 = arith.mulf %378, %354 : vector<2x32xf32>
    %380 = arith.addf %377, %379 : vector<2x32xf32>
    %c0_17 = arith.constant 0 : index
    %c0_18 = arith.constant 0 : index
    %381 = vector.load %arg5[%c0_17, %c0_18] : memref<2x32xf32, #tpu.memory_space<vmem>>, vector<2x32xf32>
    tpu.vector_store %arg5[%c0_17, %c0_18], %380 {strides = array<i32>} : memref<2x32xf32, #tpu.memory_space<vmem>>, vector<2x32xf32>,
    return
  }
  func.func @transform_0(%arg0: i32) -> (i32, i32) {
    %c0_i32 = arith.constant 0 : i32
    %c0_i32_0 = arith.constant 0 : i32
    return %arg0, %c0_i32 : i32, i32
  }
  func.func @transform_1(%arg0: i32) -> (i32, i32) {
    %c0_i32 = arith.constant 0 : i32
    %c0_i32_0 = arith.constant 0 : i32
    return %arg0, %c0_i32 : i32, i32
  }
  func.func @transform_2(%arg0: i32) -> (i32, i32) {
    %c0_i32 = arith.constant 0 : i32
    %c0_i32_0 = arith.constant 0 : i32
    %c0_i32_1 = arith.constant 0 : i32
    return %c0_i32, %c0_i32_0 : i32, i32
  }
  func.func @transform_3(%arg0: i32) -> (i32, i32) {
    %c0_i32 = arith.constant 0 : i32
    %c0_i32_0 = arith.constant 0 : i32
    %c0_i32_1 = arith.constant 0 : i32
    return %c0_i32, %c0_i32_0 : i32, i32
  }
  func.func @transform_4(%arg0: i32) -> (i32, i32) {
    %c0_i32 = arith.constant 0 : i32
    %c0_i32_0 = arith.constant 0 : i32
    return %arg0, %c0_i32 : i32, i32
  }
  func.func @transform_5(%arg0: i32) -> (i32, i32) {
    %c0_i32 = arith.constant 0 : i32
    %c0_i32_0 = arith.constant 0 : i32
    return %arg0, %c0_i32 : i32, i32
  }
}

</mosaic_0001>

<llo_original>
// kernel: tpu_custom_call.1
$region0: #{tpu_custom_call.1}
  #allocation0 [shape = 'u32[]', space=smem, size = 0x4, offset = 0x4, fixed_abs, tag = 'smem constant byte address 0x4 - core index']
  #allocation1 [shape = 'u32[72,128]{1,0:T(1,128)}', space=vmem, size = 0x9000, scoped, tag = 'internal scratch']
  %s0 = inlined_call_operand.hbm [shape: f32[2,48], index: 0, kind: input, shape index: {}]
  %s1 = inlined_call_operand.hbm [shape: f32[2,256], index: 1, kind: input, shape index: {}]
  %s2 = inlined_call_operand.hbm [shape: f32[6,32], index: 2, kind: input, shape index: {}]
  %s3 = inlined_call_operand.vmem [shape: f32[1,32], index: 3, kind: input, shape index: {}]
  %s4 = inlined_call_operand.hbm [shape: f32[2,32], index: 4, kind: output, shape index: {0}]
  %s5 = inlined_call_operand.hbm [shape: f32[2,256], index: 5, kind: output, shape index: {1}]
  %6 = xla_tuple %s4, %s5
  %s7 = sld [smem:[#allocation0]]
  $region46: #{tpu_custom_call.1} parent=0
    _
  %s9 = ssub.s32 1, %s7
  %s10 = scalar_select 0, %s9, %s7
  $region1: #{tpu_custom_call.1} parent=0
    #allocation2 [shape = 'u8[1024]{0}', space=vmem, size = 0x400, scoped, tag = 'input window, operand 0, single buffered']
    #allocation3 [shape = 's32[1]{0}', space=sflag, size = 0x4, scoped, tag = 'scoped memory for tpu_custom_call.1']
    #allocation4 [shape = 's32[1]{0}', space=sflag, size = 0x4, scoped, tag = 'scoped memory for tpu_custom_call.1']
    #allocation5 [shape = 'u8[2048]{0}', space=vmem, size = 0x800, scoped, tag = 'input window, operand 1, single buffered']
    #allocation6 [shape = 's32[1]{0}', space=sflag, size = 0x4, scoped, tag = 'scoped memory for tpu_custom_call.1']
    #allocation7 [shape = 'u8[4096]{0}', space=vmem, size = 0x1000, scoped, tag = 'input window, operand 2, single buffered']
    #allocation8 [shape = 'u8[1024]{0}', space=vmem, size = 0x400, scoped, tag = 'output window, operand 0, single buffered']
    #allocation9 [shape = 'u8[2048]{0}', space=vmem, size = 0x800, scoped, tag = 'output window, operand 1, single buffered']
    #allocation10 [shape = 's32[1]{0}', space=sflag, size = 0x4, scoped, tag = 'scoped memory for tpu_custom_call.1']
    %11 = vsyncpa [#allocation3], 0
    %12 = vsyncpa [#allocation6], 0
    %13 = vsyncpa [#allocation4], 0
    %14 = vsyncpa [#allocation10], 0
    // Predicated region
    $region2: #{tpu_custom_call.1} parent=1 // pred_check
      _
    $region3: #{tpu_custom_call.1} parent=1 // pred_check_branch
      %16 = sbr.rel (0) target = $region5
    $region4: #{tpu_custom_call.1} parent=1 // pred_region
      %18 = vsyncadd [#allocation3], 0
      %s20 = sshll.u32 %s0, 4
      %s21 = int_to_ptr.hbm [resolvable:$true] %s20
      %s22 = sshll.u32 [#allocation2], 4
      %s23 = int_to_ptr.vmem [resolvable:$true] %s22
      %25 = dma.hbm_to_vmem [thread:$0]  %s21, 32, %s23, [#allocation3]
    $region5: #{tpu_custom_call.1} parent=1 // pred_fallthru
      _
    // Predicated region
    $region6: #{tpu_custom_call.1} parent=1 // pred_check
      _
    $region7: #{tpu_custom_call.1} parent=1 // pred_check_branch
      %27 = sbr.rel (0) target = $region9
    $region8: #{tpu_custom_call.1} parent=1 // pred_region
      %29 = vsyncadd [#allocation6], 0
      %s31 = sshll.u32 %s1, 4
      %s32 = int_to_ptr.hbm [resolvable:$true] %s31
      %s33 = sshll.u32 [#allocation5], 4
      %s34 = int_to_ptr.vmem [resolvable:$true] %s33
      %36 = dma.hbm_to_vmem [thread:$0]  %s32, 64, %s34, [#allocation6]
    $region9: #{tpu_custom_call.1} parent=1 // pred_fallthru
      _
    // Predicated region
    $region10: #{tpu_custom_call.1} parent=1 // pred_check
      _
    $region11: #{tpu_custom_call.1} parent=1 // pred_check_branch
      %38 = sbr.rel (0) target = $region13
    $region12: #{tpu_custom_call.1} parent=1 // pred_region
      %40 = vsyncadd [#allocation6], 0
      %s42 = sshll.u32 %s2, 4
      %s43 = int_to_ptr.hbm [resolvable:$true] %s42
      %s44 = sshll.u32 [#allocation7], 4
      %s45 = int_to_ptr.vmem [resolvable:$true] %s44
      %47 = dma.hbm_to_vmem [thread:$0]  %s43, 128, %s45, [#allocation6]
    $region13: #{tpu_custom_call.1} parent=1 // pred_fallthru
      _
    // Predicated region
    $region14: #{tpu_custom_call.1} parent=1 // pred_check
      _
    $region15: #{tpu_custom_call.1} parent=1 // pred_check_branch
      %49 = sbr.rel (0) target = $region17
    $region16: #{tpu_custom_call.1} parent=1 // pred_region
      _
    $region17: #{tpu_custom_call.1} parent=1 // pred_fallthru
      _
    // Predicated region
    $region18: #{tpu_custom_call.1} parent=1 // pred_check
      _
    $region19: #{tpu_custom_call.1} parent=1 // pred_check_branch
      %51 = sbr.rel (0) target = $region21
    $region20: #{tpu_custom_call.1} parent=1 // pred_region
      %53 = dma.done [#allocation3], 32
    $region21: #{tpu_custom_call.1} parent=1 // pred_fallthru
      _
    // Predicated region
    $region22: #{tpu_custom_call.1} parent=1 // pred_check
      _
    $region23: #{tpu_custom_call.1} parent=1 // pred_check_branch
      %55 = sbr.rel (0) target = $region25
    $region24: #{tpu_custom_call.1} parent=1 // pred_region
      %57 = dma.done [#allocation6], 64
    $region25: #{tpu_custom_call.1} parent=1 // pred_fallthru
      _
    // Predicated region
    $region26: #{tpu_custom_call.1} parent=1 // pred_check
      _
    $region27: #{tpu_custom_call.1} parent=1 // pred_check_branch
      %59 = sbr.rel (0) target = $region29
    $region28: #{tpu_custom_call.1} parent=1 // pred_region
      %61 = dma.done [#allocation6], 128
    $region29: #{tpu_custom_call.1} parent=1 // pred_fallthru
      _
    %v62 = vld [vmem:[#allocation2] sm:$0x3]
    %v63 = vld [vmem:[#allocation7] sm:$0x3f]
    %v64 = vld [vmem:[%s3] sm:$0x1]
    %66 = vset.pattern.permute.xlu0 0
    %67 = vperm.xlu0 %66, %v62
    %v68 = vpop.permute.xlu0 %67
    %v70 = vperm.slane %v63, 0
    %v71 = vmul.f32 %v68, %v70
    %v73 = vperm.slane %v64, 0
    %v75 = vadd.f32 %v73, %v71
    %76 = vset.pattern.permute.xlu0 1
    %77 = vperm.xlu0 %76, %v62
    %v78 = vpop.permute.xlu0 %77
    %v80 = vperm.slane %v63, 1
    %v81 = vmul.f32 %v78, %v80
    %v82 = vadd.f32 %v75, %v81
    %83 = vset.pattern.permute.xlu0 2
    %84 = vperm.xlu0 %83, %v62
    %v85 = vpop.permute.xlu0 %84
    %v87 = vperm.slane %v63, 2
    %v88 = vmul.f32 %v85, %v87
    %v89 = vadd.f32 %v82, %v88
    %90 = vset.pattern.permute.xlu0 3
    %91 = vperm.xlu0 %90, %v62
    %v92 = vpop.permute.xlu0 %91
    %v94 = vperm.slane %v63, 3
    %v95 = vmul.f32 %v92, %v94
    %v96 = vadd.f32 %v89, %v95
    %97 = vset.pattern.permute.xlu0 4
    %98 = vperm.xlu0 %97, %v62
    %v99 = vpop.permute.xlu0 %98
    %v101 = vperm.slane %v63, 4
    %v102 = vmul.f32 %v99, %v101
    %v103 = vadd.f32 %v96, %v102
    %104 = vset.pattern.permute.xlu0 5
    %105 = vperm.xlu0 %104, %v62
    %v106 = vpop.permute.xlu0 %105
    %v108 = vperm.slane %v63, 5
    %v109 = vmul.f32 %v106, %v108
    %v110 = vadd.f32 %v103, %v109
    %v111 = vmax.f32 %v110, 0.0
    %112 = vset.pattern.permute.xlu0 6
    %113 = vperm.xlu0 %112, %v62
    %v114 = vpop.permute.xlu0 %113
    %v116 = vmul.f32 %v114, %v70
    %v117 = vadd.f32 %v73, %v116
    %118 = vset.pattern.permute.xlu0 7
    %119 = vperm.xlu0 %118, %v62
    %v120 = vpop.permute.xlu0 %119
    %v122 = vmul.f32 %v120, %v80
    %v123 = vadd.f32 %v117, %v122
    %124 = vset.pattern.permute.xlu0 8
    %125 = vperm.xlu0 %124, %v62
    %v126 = vpop.permute.xlu0 %125
    %v128 = vmul.f32 %v126, %v87
    %v129 = vadd.f32 %v123, %v128
    %130 = vset.pattern.permute.xlu0 9
    %131 = vperm.xlu0 %130, %v62
    %v132 = vpop.permute.xlu0 %131
    %v134 = vmul.f32 %v132, %v94
    %v135 = vadd.f32 %v129, %v134
    %136 = vset.pattern.permute.xlu0 10
    %137 = vperm.xlu0 %136, %v62
    %v138 = vpop.permute.xlu0 %137
    %v140 = vmul.f32 %v138, %v101
    %v141 = vadd.f32 %v135, %v140
    %142 = vset.pattern.permute.xlu0 11
    %143 = vperm.xlu0 %142, %v62
    %v144 = vpop.permute.xlu0 %143
    %v146 = vmul.f32 %v144, %v108
    %v147 = vadd.f32 %v141, %v146
    %v148 = vmax.f32 %v147, 0.0
    %149 = vset.pattern.permute.xlu0 12
    %150 = vperm.xlu0 %149, %v62
    %v151 = vpop.permute.xlu0 %150
    %v153 = vmul.f32 %v151, %v70
    %v154 = vadd.f32 %v73, %v153
    %155 = vset.pattern.permute.xlu0 13
    %156 = vperm.xlu0 %155, %v62
    %v157 = vpop.permute.xlu0 %156
    %v159 = vmul.f32 %v157, %v80
    %v160 = vadd.f32 %v154, %v159
    %161 = vset.pattern.permute.xlu0 14
    %162 = vperm.xlu0 %161, %v62
    %v163 = vpop.permute.xlu0 %162
    %v165 = vmul.f32 %v163, %v87
    %v166 = vadd.f32 %v160, %v165
    %167 = vset.pattern.permute.xlu0 15
    %168 = vperm.xlu0 %167, %v62
    %v169 = vpop.permute.xlu0 %168
    %v171 = vmul.f32 %v169, %v94
    %v172 = vadd.f32 %v166, %v171
    %173 = vset.pattern.permute.xlu0 16
    %174 = vperm.xlu0 %173, %v62
    %v175 = vpop.permute.xlu0 %174
    %v177 = vmul.f32 %v175, %v101
    %v178 = vadd.f32 %v172, %v177
    %179 = vset.pattern.permute.xlu0 17
    %180 = vperm.xlu0 %179, %v62
    %v181 = vpop.permute.xlu0 %180
    %v183 = vmul.f32 %v181, %v108
    %v184 = vadd.f32 %v178, %v183
    %v185 = vmax.f32 %v184, 0.0
    %186 = vset.pattern.permute.xlu0 18
    %187 = vperm.xlu0 %186, %v62
    %v188 = vpop.permute.xlu0 %187
    %v190 = vmul.f32 %v188, %v70
    %v191 = vadd.f32 %v73, %v190
    %192 = vset.pattern.permute.xlu0 19
    %193 = vperm.xlu0 %192, %v62
    %v194 = vpop.permute.xlu0 %193
    %v196 = vmul.f32 %v194, %v80
    %v197 = vadd.f32 %v191, %v196
    %198 = vset.pattern.permute.xlu0 20
    %199 = vperm.xlu0 %198, %v62
    %v200 = vpop.permute.xlu0 %199
    %v202 = vmul.f32 %v200, %v87
    %v203 = vadd.f32 %v197, %v202
    %204 = vset.pattern.permute.xlu0 21
    %205 = vperm.xlu0 %204, %v62
    %v206 = vpop.permute.xlu0 %205
    %v208 = vmul.f32 %v206, %v94
    %v209 = vadd.f32 %v203, %v208
    %210 = vset.pattern.permute.xlu0 22
    %211 = vperm.xlu0 %210, %v62
    %v212 = vpop.permute.xlu0 %211
    %v214 = vmul.f32 %v212, %v101
    %v215 = vadd.f32 %v209, %v214
    %216 = vset.pattern.permute.xlu0 23
    %217 = vperm.xlu0 %216, %v62
    %v218 = vpop.permute.xlu0 %217
    %v220 = vmul.f32 %v218, %v108
    %v221 = vadd.f32 %v215, %v220
    %v222 = vmax.f32 %v221, 0.0
    %223 = vset.pattern.permute.xlu0 24
    %224 = vperm.xlu0 %223, %v62
    %v225 = vpop.permute.xlu0 %224
    %v227 = vmul.f32 %v225, %v70
    %v228 = vadd.f32 %v73, %v227
    %229 = vset.pattern.permute.xlu0 25
    %230 = vperm.xlu0 %229, %v62
    %v231 = vpop.permute.xlu0 %230
    %v233 = vmul.f32 %v231, %v80
    %v234 = vadd.f32 %v228, %v233
    %235 = vset.pattern.permute.xlu0 26
    %236 = vperm.xlu0 %235, %v62
    %v237 = vpop.permute.xlu0 %236
    %v239 = vmul.f32 %v237, %v87
    %v240 = vadd.f32 %v234, %v239
    %241 = vset.pattern.permute.xlu0 27
    %242 = vperm.xlu0 %241, %v62
    %v243 = vpop.permute.xlu0 %242
    %v245 = vmul.f32 %v243, %v94
    %v246 = vadd.f32 %v240, %v245
    %247 = vset.pattern.permute.xlu0 28
    %248 = vperm.xlu0 %247, %v62
    %v249 = vpop.permute.xlu0 %248
    %v251 = vmul.f32 %v249, %v101
    %v252 = vadd.f32 %v246, %v251
    %253 = vset.pattern.permute.xlu0 29
    %254 = vperm.xlu0 %253, %v62
    %v255 = vpop.permute.xlu0 %254
    %v257 = vmul.f32 %v255, %v108
    %v258 = vadd.f32 %v252, %v257
    %v259 = vmax.f32 %v258, 0.0
    %260 = vset.pattern.permute.xlu0 30
    %261 = vperm.xlu0 %260, %v62
    %v262 = vpop.permute.xlu0 %261
    %v264 = vmul.f32 %v262, %v70
    %v265 = vadd.f32 %v73, %v264
    %266 = vset.pattern.permute.xlu0 31
    %267 = vperm.xlu0 %266, %v62
    %v268 = vpop.permute.xlu0 %267
    %v270 = vmul.f32 %v268, %v80
    %v271 = vadd.f32 %v265, %v270
    %272 = vset.pattern.permute.xlu0 32
    %273 = vperm.xlu0 %272, %v62
    %v274 = vpop.permute.xlu0 %273
    %v276 = vmul.f32 %v274, %v87
    %v277 = vadd.f32 %v271, %v276
    %278 = vset.pattern.permute.xlu0 33
    %279 = vperm.xlu0 %278, %v62
    %v280 = vpop.permute.xlu0 %279
    %v282 = vmul.f32 %v280, %v94
    %v283 = vadd.f32 %v277, %v282
    %284 = vset.pattern.permute.xlu0 34
    %285 = vperm.xlu0 %284, %v62
    %v286 = vpop.permute.xlu0 %285
    %v288 = vmul.f32 %v286, %v101
    %v289 = vadd.f32 %v283, %v288
    %290 = vset.pattern.permute.xlu0 35
    %291 = vperm.xlu0 %290, %v62
    %v292 = vpop.permute.xlu0 %291
    %v294 = vmul.f32 %v292, %v108
    %v295 = vadd.f32 %v289, %v294
    %v296 = vmax.f32 %v295, 0.0
    %297 = vset.pattern.permute.xlu0 36
    %298 = vperm.xlu0 %297, %v62
    %v299 = vpop.permute.xlu0 %298
    %v301 = vmul.f32 %v299, %v70
    %v302 = vadd.f32 %v73, %v301
    %303 = vset.pattern.permute.xlu0 37
    %304 = vperm.xlu0 %303, %v62
    %v305 = vpop.permute.xlu0 %304
    %v307 = vmul.f32 %v305, %v80
    %v308 = vadd.f32 %v302, %v307
    %309 = vset.pattern.permute.xlu0 38
    %310 = vperm.xlu0 %309, %v62
    %v311 = vpop.permute.xlu0 %310
    %v313 = vmul.f32 %v311, %v87
    %v314 = vadd.f32 %v308, %v313
    %315 = vset.pattern.permute.xlu0 39
    %316 = vperm.xlu0 %315, %v62
    %v317 = vpop.permute.xlu0 %316
    %v319 = vmul.f32 %v317, %v94
    %v320 = vadd.f32 %v314, %v319
    %321 = vset.pattern.permute.xlu0 40
    %322 = vperm.xlu0 %321, %v62
    %v323 = vpop.permute.xlu0 %322
    %v325 = vmul.f32 %v323, %v101
    %v326 = vadd.f32 %v320, %v325
    %327 = vset.pattern.permute.xlu0 41
    %328 = vperm.xlu0 %327, %v62
    %v329 = vpop.permute.xlu0 %328
    %v331 = vmul.f32 %v329, %v108
    %v332 = vadd.f32 %v326, %v331
    %v333 = vmax.f32 %v332, 0.0
    %334 = vset.pattern.permute.xlu0 42
    %335 = vperm.xlu0 %334, %v62
    %v336 = vpop.permute.xlu0 %335
    %v338 = vmul.f32 %v336, %v70
    %v339 = vadd.f32 %v73, %v338
    %340 = vset.pattern.permute.xlu0 43
    %341 = vperm.xlu0 %340, %v62
    %v342 = vpop.permute.xlu0 %341
    %v344 = vmul.f32 %v342, %v80
    %v345 = vadd.f32 %v339, %v344
    %346 = vset.pattern.permute.xlu0 44
    %347 = vperm.xlu0 %346, %v62
    %v348 = vpop.permute.xlu0 %347
    %v350 = vmul.f32 %v348, %v87
    %v351 = vadd.f32 %v345, %v350
    %352 = vset.pattern.permute.xlu0 45
    %353 = vperm.xlu0 %352, %v62
    %v354 = vpop.permute.xlu0 %353
    %v356 = vmul.f32 %v354, %v94
    %v357 = vadd.f32 %v351, %v356
    %358 = vset.pattern.permute.xlu0 46
    %359 = vperm.xlu0 %358, %v62
    %v360 = vpop.permute.xlu0 %359
    %v362 = vmul.f32 %v360, %v101
    %v363 = vadd.f32 %v357, %v362
    %364 = vset.pattern.permute.xlu0 47
    %365 = vperm.xlu0 %364, %v62
    %v366 = vpop.permute.xlu0 %365
    %v368 = vmul.f32 %v366, %v108
    %v369 = vadd.f32 %v363, %v368
    %v370 = vmax.f32 %v369, 0.0
    %v371 = vmax.f32 %v111, %v148
    %v372 = vmax.f32 %v371, %v185
    %v373 = vmax.f32 %v372, %v222
    %v374 = vmax.f32 %v373, %v259
    %v375 = vmax.f32 %v374, %v296
    %v376 = vmax.f32 %v375, %v333
    %v377 = vmax.f32 %v376, %v370
    %v378 = vsub.f32 %v111, %v377
    %v379 = vmul.f32 %v378, 1.442695
    %v380 = vpow.pop %v379
    %v381 = vsub.f32 %v148, %v377
    %v382 = vmul.f32 %v381, 1.442695
    %v383 = vpow.pop %v382
    %v384 = vsub.f32 %v185, %v377
    %v385 = vmul.f32 %v384, 1.442695
    %v386 = vpow.pop %v385
    %v387 = vsub.f32 %v222, %v377
    %v388 = vmul.f32 %v387, 1.442695
    %v389 = vpow.pop %v388
    %v390 = vsub.f32 %v259, %v377
    %v391 = vmul.f32 %v390, 1.442695
    %v392 = vpow.pop %v391
    %v393 = vsub.f32 %v296, %v377
    %v394 = vmul.f32 %v393, 1.442695
    %v395 = vpow.pop %v394
    %v396 = vsub.f32 %v333, %v377
    %v397 = vmul.f32 %v396, 1.442695
    %v398 = vpow.pop %v397
    %v399 = vsub.f32 %v370, %v377
    %v400 = vmul.f32 %v399, 1.442695
    %v401 = vpow.pop %v400
    %v402 = vadd.f32 %v380, %v383
    %v403 = vadd.f32 %v402, %v386
    %v404 = vadd.f32 %v403, %v389
    %v405 = vadd.f32 %v404, %v392
    %v406 = vadd.f32 %v405, %v395
    %v407 = vadd.f32 %v406, %v398
    %v408 = vadd.f32 %v407, %v401
    %v409 = vrcp.pop %v408
    %v410 = vmul.f32 %v408, %v409
    %v411 = vsub.f32 1.0, %v410
    %v412 = vmul.f32 %v409, %v411
    %v413 = vadd.f32 %v409, %v412
    %vm414 = vweird.f32 %v408
    %vm415 = vweird.f32 %v409
    %vm416 = vmor %vm414, %vm415
    %v417 = vsel %vm416, %v409, %v413
    %v418 = vand.u32 2147483647, %v408
    %vm419 = vcmp.eq.f32.partialorder %v418, 8.507059e+37
    %v420 = vand.u32 %v408, 2147483648
    %v421 = vor.u32 1.1754944e-38, %v420
    %v422 = vsel %vm419, %v421, %v417
    %v423 = vmul.f32 1.0, %v422
    %v424 = vmul.f32 %v380, %v423
    %v425 = vmul.f32 %v383, %v423
    %v426 = vmul.f32 %v386, %v423
    %v427 = vmul.f32 %v389, %v423
    %v428 = vmul.f32 %v392, %v423
    %v429 = vmul.f32 %v395, %v423
    %v430 = vmul.f32 %v398, %v423
    %v431 = vmul.f32 %v401, %v423
    %433 = vrot.lane.b32.xlu0 %v425, 32
    %v434 = vpop.permute.xlu0 %433
    %437 = vrot.lane.b32.xlu0 %v426, 64
    %v438 = vpop.permute.xlu0 %437
    %441 = vrot.lane.b32.xlu0 %v427, 96
    %v442 = vpop.permute.xlu0 %441
    %445 = vrot.lane.b32.xlu0 %v429, 32
    %v446 = vpop.permute.xlu0 %445
    %449 = vrot.lane.b32.xlu0 %v430, 64
    %v450 = vpop.permute.xlu0 %449
    %453 = vrot.lane.b32.xlu0 %v431, 96
    %v454 = vpop.permute.xlu0 %453
    %vm456 = vcmask 261120
    %v457 = vsel %vm456, %v424, %v434
    %vm458 = vcmask 523264
    %v459 = vsel %vm458, %v457, %v438
    %vm460 = vcmask 785408
    %v461 = vsel %vm460, %v459, %v442
    %v462 = vsel %vm456, %v428, %v446
    %v463 = vsel %vm458, %v462, %v450
    %v464 = vsel %vm460, %v463, %v454
    %v467 = vrot.slane %v464, 6
    %vm468 = vcmask 1041408
    %v469 = vsel %vm468, %v461, %v467
    %471 = vst [vmem:[#allocation9] sm:$0xf] %v469
    %v472 = vld [vmem:[#allocation5] sm:$0xf]
    %v473 = vmul.f32 %v472, %v424
    %v474 = vmul.f32 %v472, %v434
    %476 = vrot.lane.b32.xlu0 %v474, 96
    %v477 = vpop.permute.xlu0 %476
    %v479 = vadd.f32 %v473, %v477
    %v480 = vmul.f32 %v472, %v438
    %482 = vrot.lane.b32.xlu0 %v480, 64
    %v483 = vpop.permute.xlu0 %482
    %v485 = vadd.f32 %v479, %v483
    %v486 = vmul.f32 %v472, %v442
    %488 = vrot.lane.b32.xlu0 %v486, 32
    %v489 = vpop.permute.xlu0 %488
    %v491 = vadd.f32 %v485, %v489
    %v493 = vrot.slane %v472, 2
    %v495 = vmul.f32 %v493, %v428
    %v496 = vadd.f32 %v491, %v495
    %497 = vrot.lane.b32.xlu0 %v472, 96
    %v498 = vpop.permute.xlu0 %497
    %v499 = vrot.slane %v498, 2
    %v501 = vmul.f32 %v499, %v429
    %v502 = vadd.f32 %v496, %v501
    %503 = vrot.lane.b32.xlu0 %v472, 64
    %v504 = vpop.permute.xlu0 %503
    %v505 = vrot.slane %v504, 2
    %v507 = vmul.f32 %v505, %v430
    %v508 = vadd.f32 %v502, %v507
    %509 = vrot.lane.b32.xlu0 %v472, 32
    %v510 = vpop.permute.xlu0 %509
    %v511 = vrot.slane %v510, 2
    %v513 = vmul.f32 %v511, %v431
    %v514 = vadd.f32 %v508, %v513
    %vm515 = vcmask 254976
    %516 = vst.msk [vmem:[#allocation8] sm:$0x3] %vm515, %v514
    // Predicated region
    $region30: #{tpu_custom_call.1} parent=1 // pred_check
      _
    $region31: #{tpu_custom_call.1} parent=1 // pred_check_branch
      %518 = sbr.rel (0) target = $region33
    $region32: #{tpu_custom_call.1} parent=1 // pred_region
      %520 = vsyncadd [#allocation4], 0
      %s522 = sshll.u32 [#allocation8], 4
      %s523 = int_to_ptr.vmem [resolvable:$true] %s522
      %s524 = sshll.u32 %s4, 4
      %s525 = int_to_ptr.hbm [resolvable:$true] %s524
      %527 = dma.vmem_to_hbm [thread:$0]  %s523, 32, %s525, [#allocation4]
    $region33: #{tpu_custom_call.1} parent=1 // pred_fallthru
      _
    // Predicated region
    $region34: #{tpu_custom_call.1} parent=1 // pred_check
      _
    $region35: #{tpu_custom_call.1} parent=1 // pred_check_branch
      %529 = sbr.rel (0) target = $region37
    $region36: #{tpu_custom_call.1} parent=1 // pred_region
      %531 = vsyncadd [#allocation10], 0
      %s533 = sshll.u32 [#allocation9], 4
      %s534 = int_to_ptr.vmem [resolvable:$true] %s533
      %s535 = sshll.u32 %s5, 4
      %s536 = int_to_ptr.hbm [resolvable:$true] %s535
      %538 = dma.vmem_to_hbm [thread:$0]  %s534, 64, %s536, [#allocation10]
    $region37: #{tpu_custom_call.1} parent=1 // pred_fallthru
      _
    // Predicated region
    $region38: #{tpu_custom_call.1} parent=1 // pred_check
      _
    $region39: #{tpu_custom_call.1} parent=1 // pred_check_branch
      %540 = sbr.rel (0) target = $region41
    $region40: #{tpu_custom_call.1} parent=1 // pred_region
      %542 = dma.done [#allocation4], 32
    $region41: #{tpu_custom_call.1} parent=1 // pred_fallthru
      _
    // Predicated region
    $region42: #{tpu_custom_call.1} parent=1 // pred_check
      _
    $region43: #{tpu_custom_call.1} parent=1 // pred_check_branch
      %544 = sbr.rel (0) target = $region45
    $region44: #{tpu_custom_call.1} parent=1 // pred_region
      %546 = dma.done [#allocation10], 64
    $region45: #{tpu_custom_call.1} parent=1 // pred_fallthru
      _
    %547 = vsyncpa [#allocation3], 1
    %548 = vsyncpa [#allocation6], 1
    %549 = vsyncpa [#allocation4], 1
    %550 = vsyncpa [#allocation10], 1

</llo_original>
